<compile_context>
chip_gen: v5e
topology: v5e:2x2
jax: 0.10.0
libtpu: 0.0.40
codegen_flags: <defaults>
</compile_context>

<pallas_src>
import jax
import jax.numpy as jnp
from jax.experimental import pallas as pl
from jax.experimental.pallas import tpu as pltpu

NUM_CLASSES = 10
HIDDEN = 50


def _round_up(x, m):
    return ((x + m - 1) // m) * m


def mlp_kernel(x_ref, w1_ref, b1_ref, w2_ref, b2_ref, o_ref):
    # x_ref:  (TB, D)          w1_ref: (D, H_pad)      b1_ref: (1, H_pad) f32
    # w2_ref: (H_pad, C_pad)   b2_ref: (1, C_pad) f32  o_ref:  (TB, C_pad)
    h = jnp.dot(x_ref[...], w1_ref[...], preferred_element_type=jnp.float32)
    h = jnp.maximum(h + b1_ref[...], 0.0)            # bias + ReLU in f32 (VPU)
    o = jnp.dot(h.astype(w2_ref.dtype), w2_ref[...],
                preferred_element_type=jnp.float32)
    o_ref[...] = (o + b2_ref[...]).astype(o_ref.dtype)


def prepare_params(w1, b1, w2, b2, *, compute_dtype=jnp.float32):
    """One-time parameter prep: lane-pad H/C to 128, cast weights to the
    compute dtype.  Biases stay f32 (added in-kernel; padded lanes stay 0)."""
    D, H = w1.shape
    C = w2.shape[1]
    H_pad = _round_up(H, 128)
    C_pad = _round_up(C, 128)

    w1_p = jnp.zeros((D, H_pad), compute_dtype).at[:, :H].set(w1.astype(compute_dtype))
    w2_p = jnp.zeros((H_pad, C_pad), compute_dtype).at[:H, :C].set(w2.astype(compute_dtype))
    b1_p = jnp.zeros((1, H_pad), jnp.float32).at[0, :H].set(b1.reshape(-1).astype(jnp.float32))
    b2_p = jnp.zeros((1, C_pad), jnp.float32).at[0, :C].set(b2.reshape(-1).astype(jnp.float32))
    return dict(w1=w1_p, b1=b1_p, w2=w2_p, b2=b2_p, num_classes=C)


def mlp_forward(x, params, *, block_b=1024, small_batch_fastpath=True, unpad=True):
    """y = relu(x @ w1 + b1) @ w2 + b2 via a lane-padded Pallas kernel.

    x: (B, D) unpadded.  params: output of prepare_params().
    unpad=True  -> (B, num_classes) (drop-in module semantics).
    unpad=False -> padded (B_pad, 128) kernel output (skips the extra HBM
                   round trip of the slice; consumer reads the first C lanes).
    """
    w1_p, b1_p, w2_p, b2_p = params["w1"], params["b1"], params["w2"], params["b2"]
    C = params["num_classes"]
    B, D = x.shape
    H_pad = w1_p.shape[1]
    C_pad = w2_p.shape[1]
    cdt = w1_p.dtype
    out_dtype = cdt  # bf16 IO when compute is bf16 -> halves output write bytes

    if small_batch_fastpath and B <= 512:
        # Whole forward is a few KFLOP; kernel launch + padding overhead would
        # dominate.  Let XLA fuse it.
        y = jnp.maximum(
            jnp.dot(x.astype(cdt), w1_p, preferred_element_type=jnp.float32) + b1_p, 0.0)
        y = jnp.dot(y.astype(cdt), w2_p, preferred_element_type=jnp.float32) + b2_p
        y = y.astype(out_dtype)
        return y[:, :C] if unpad else y

    # Batch tiling: multiple of 8 sublanes, capped by block_b; pad only the
    # tail of the batch axis (no lane padding of x).  On v7x, grids >= 2 steps
    # let the "parallel" axis split across both TensorCores.
    TB = min(_round_up(block_b, 8), _round_up(B, 8))
    B_pad = _round_up(B, TB)

    x_c = x.astype(cdt)
    if B_pad != B:
        x_c = jnp.pad(x_c, ((0, B_pad - B), (0, 0)))

    grid = (B_pad // TB,)
    out = pl.pallas_call(
        mlp_kernel,
        out_shape=jax.ShapeDtypeStruct((B_pad, C_pad), out_dtype),
        grid_spec=pltpu.PrefetchScalarGridSpec(
            num_scalar_prefetch=0,
            grid=grid,
            in_specs=[
                pl.BlockSpec((TB, D), lambda i: (i, 0)),       # activations move with grid
                pl.BlockSpec((D, H_pad), lambda i: (0, 0)),    # weights VMEM-resident
                pl.BlockSpec((1, H_pad), lambda i: (0, 0)),    # fc1 bias
                pl.BlockSpec((H_pad, C_pad), lambda i: (0, 0)),
                pl.BlockSpec((1, C_pad), lambda i: (0, 0)),    # fc2 bias
            ],
            out_specs=pl.BlockSpec((TB, C_pad), lambda i: (i, 0)),
        ),
        compiler_params=pltpu.CompilerParams(
            # Batch-independent grid -> shardable across v7x's 2 TensorCores.
            dimension_semantics=("parallel",),
        ),
    )(x_c, w1_p, b1_p, w2_p, b2_p)

    if unpad:
        return out[:B, :C]
    return out


if __name__ == "__main__":
    batch = 8
    input_size = 64  # small "flattened image" feature size

    key = jax.random.PRNGKey(0)
    kx, kw1, kb1, kw2, kb2 = jax.random.split(key, 5)

    # Deterministic inputs / PyTorch-style uniform parameter ranges.
    x = jax.random.normal(kx, (batch, input_size), dtype=jnp.float32)

    bound1 = 1.0 / (input_size ** 0.5)
    w1 = jax.random.uniform(kw1, (input_size, HIDDEN), jnp.float32, -bound1, bound1)
    b1 = jax.random.uniform(kb1, (HIDDEN,), jnp.float32, -bound1, bound1)

    bound2 = 1.0 / (HIDDEN ** 0.5)
    w2 = jax.random.uniform(kw2, (HIDDEN, NUM_CLASSES), jnp.float32, -bound2, bound2)
    b2 = jax.random.uniform(kb2, (NUM_CLASSES,), jnp.float32, -bound2, bound2)

    # Pure-JAX reference (same semantics as the PyTorch forward).
    ref = jnp.maximum(x @ w1 + b1[None, :], 0.0) @ w2 + b2[None, :]

    # f32 path — force the Pallas kernel even at tiny batch for the demo.
    params = prepare_params(w1, b1, w2, b2)
    out = mlp_forward(x, params, small_batch_fastpath=False)
    out = jax.block_until_ready(out)
    assert out.shape == (batch, NUM_CLASSES)
    assert jnp.allclose(out, ref, atol=1e-5, rtol=1e-5)

    # bf16 compute/IO path (recommended default on v5e/v6e/v7x: halves HBM
    # bytes; f32 accumulation preserved).  Looser tolerance, expected.
    params_bf16 = prepare_params(w1, b1, w2, b2, compute_dtype=jnp.bfloat16)
    out_bf16 = mlp_forward(x, params_bf16, small_batch_fastpath=False)
    out_bf16 = jax.block_until_ready(out_bf16)
    assert out_bf16.dtype == jnp.bfloat16
    assert jnp.allclose(out_bf16.astype(jnp.float32), ref, atol=5e-2, rtol=5e-2)

    print("KERNEL_OK")
</pallas_src>

<mosaic_0001>
module attributes {stable_mosaic.version = 11 : i64} {
  func.func @mlp_kernel(%arg0: i32, %arg1: memref<8x64xf32, #tpu.memory_space<vmem>>, %arg2: memref<64x128xf32, #tpu.memory_space<vmem>>, %arg3: memref<1x128xf32, #tpu.memory_space<vmem>>, %arg4: memref<128x128xf32, #tpu.memory_space<vmem>>, %arg5: memref<1x128xf32, #tpu.memory_space<vmem>>, %arg6: memref<8x128xf32, #tpu.memory_space<vmem>>) attributes {dimension_semantics = [#tpu.dimension_semantics<parallel>], iteration_bounds = array<i64: 1>, scalar_prefetch = 0 : i64, scratch_operands = 0 : i64, tpu.core_type = #tpu.core_type<tc>, window_params = [{transform_indices = @transform_0, window_bounds = array<i64: 8, 64>}, {pipeline_mode = #tpu.pipeline_mode<synchronous>, transform_indices = @transform_1, window_bounds = array<i64: 64, 128>}, {pipeline_mode = #tpu.pipeline_mode<synchronous>, transform_indices = @transform_2, window_bounds = array<i64: 1, 128>}, {pipeline_mode = #tpu.pipeline_mode<synchronous>, transform_indices = @transform_3, window_bounds = array<i64: 128, 128>}, {pipeline_mode = #tpu.pipeline_mode<synchronous>, transform_indices = @transform_4, window_bounds = array<i64: 1, 128>}, {transform_indices = @transform_5, window_bounds = array<i64: 8, 128>}]} {
    %c0 = arith.constant 0 : index
    %c0_0 = arith.constant 0 : index
    %0 = vector.load %arg1[%c0, %c0_0] : memref<8x64xf32, #tpu.memory_space<vmem>>, vector<8x64xf32>
    %c0_1 = arith.constant 0 : index
    %c0_2 = arith.constant 0 : index
    %1 = vector.load %arg2[%c0_1, %c0_2] : memref<64x128xf32, #tpu.memory_space<vmem>>, vector<64x128xf32>
    %cst = arith.constant dense<0.000000e+00> : vector<8x128xf32>
    %2 = tpu.matmul %0, %1, %cst {dimension_numbers = #tpu.dot_dimension_numbers<[1], [0], [0], [1], [0, 0, 1, 1], [], []>} : vector<8x64xf32>, vector<64x128xf32>, vector<8x128xf32> -> vector<8x128xf32>
    %c0_3 = arith.constant 0 : index
    %c0_4 = arith.constant 0 : index
    %3 = vector.load %arg3[%c0_3, %c0_4] : memref<1x128xf32, #tpu.memory_space<vmem>>, vector<1x128xf32>
    %4 = vector.broadcast %3 : vector<1x128xf32> to vector<8x128xf32>
    %5 = arith.addf %2, %4 : vector<8x128xf32>
    %cst_5 = arith.constant 0.000000e+00 : f32
    %6 = vector.broadcast %cst_5 : f32 to vector<8x128xf32>
    %7 = arith.maximumf %5, %6 : vector<8x128xf32>
    %c0_6 = arith.constant 0 : index
    %c0_7 = arith.constant 0 : index
    %8 = vector.load %arg4[%c0_6, %c0_7] : memref<128x128xf32, #tpu.memory_space<vmem>>, vector<128x128xf32>
    %cst_8 = arith.constant dense<0.000000e+00> : vector<8x128xf32>
    %9 = tpu.matmul %7, %8, %cst_8 {dimension_numbers = #tpu.dot_dimension_numbers<[1], [0], [0], [1], [0, 0, 1, 1], [], []>} : vector<8x128xf32>, vector<128x128xf32>, vector<8x128xf32> -> vector<8x128xf32>
    %c0_9 = arith.constant 0 : index
    %c0_10 = arith.constant 0 : index
    %10 = vector.load %arg5[%c0_9, %c0_10] : memref<1x128xf32, #tpu.memory_space<vmem>>, vector<1x128xf32>
    %11 = vector.broadcast %10 : vector<1x128xf32> to vector<8x128xf32>
    %12 = arith.addf %9, %11 : vector<8x128xf32>
    %c0_11 = arith.constant 0 : index
    %c0_12 = arith.constant 0 : index
    %13 = vector.load %arg6[%c0_11, %c0_12] : memref<8x128xf32, #tpu.memory_space<vmem>>, vector<8x128xf32>
    tpu.vector_store %arg6[%c0_11, %c0_12], %12 {strides = array<i32>} : memref<8x128xf32, #tpu.memory_space<vmem>>, vector<8x128xf32>,
    return
  }
  func.func @transform_0(%arg0: i32) -> (i32, i32) {
    %c0_i32 = arith.constant 0 : i32
    %c0_i32_0 = arith.constant 0 : i32
    return %arg0, %c0_i32 : i32, i32
  }
  func.func @transform_1(%arg0: i32) -> (i32, i32) {
    %c0_i32 = arith.constant 0 : i32
    %c0_i32_0 = arith.constant 0 : i32
    %c0_i32_1 = arith.constant 0 : i32
    return %c0_i32, %c0_i32_0 : i32, i32
  }
  func.func @transform_2(%arg0: i32) -> (i32, i32) {
    %c0_i32 = arith.constant 0 : i32
    %c0_i32_0 = arith.constant 0 : i32
    %c0_i32_1 = arith.constant 0 : i32
    return %c0_i32, %c0_i32_0 : i32, i32
  }
  func.func @transform_3(%arg0: i32) -> (i32, i32) {
    %c0_i32 = arith.constant 0 : i32
    %c0_i32_0 = arith.constant 0 : i32
    %c0_i32_1 = arith.constant 0 : i32
    return %c0_i32, %c0_i32_0 : i32, i32
  }
  func.func @transform_4(%arg0: i32) -> (i32, i32) {
    %c0_i32 = arith.constant 0 : i32
    %c0_i32_0 = arith.constant 0 : i32
    %c0_i32_1 = arith.constant 0 : i32
    return %c0_i32, %c0_i32_0 : i32, i32
  }
  func.func @transform_5(%arg0: i32) -> (i32, i32) {
    %c0_i32 = arith.constant 0 : i32
    %c0_i32_0 = arith.constant 0 : i32
    return %arg0, %c0_i32 : i32, i32
  }
}

</mosaic_0001>

<llo_original>
// kernel: tpu_custom_call.1
$region0: #{tpu_custom_call.1}
  #allocation0 [shape = 'u32[]', space=smem, size = 0x4, offset = 0x4, fixed_abs, tag = 'smem constant byte address 0x4 - core index']
  #allocation1 [shape = 'u32[72,128]{1,0:T(1,128)}', space=vmem, size = 0x9000, scoped, tag = 'internal scratch']
  %s0 = inlined_call_operand.hbm [shape: f32[8,64], index: 0, kind: input, shape index: {}]
  %s1 = inlined_call_operand.hbm [shape: f32[64,128], index: 1, kind: input, shape index: {}]
  %s2 = inlined_call_operand.vmem [shape: f32[1,128], index: 2, kind: input, shape index: {}]
  %s3 = inlined_call_operand.hbm [shape: f32[128,128], index: 3, kind: input, shape index: {}]
  %s4 = inlined_call_operand.vmem [shape: f32[1,128], index: 4, kind: input, shape index: {}]
  %s5 = inlined_call_operand.hbm [shape: f32[8,128], index: 5, kind: output, shape index: {}]
  %s6 = sld [smem:[#allocation0]]
  $region42: #{tpu_custom_call.1} parent=0
    _
  %s8 = ssub.s32 1, %s6
  %s9 = scalar_select 0, %s8, %s6
  $region1: #{tpu_custom_call.1} parent=0
    #allocation2 [shape = 'u8[4096]{0}', space=vmem, size = 0x1000, scoped, tag = 'input window, operand 0, single buffered']
    #allocation3 [shape = 's32[1]{0}', space=sflag, size = 0x4, scoped, tag = 'scoped memory for tpu_custom_call.1']
    #allocation4 [shape = 's32[1]{0}', space=sflag, size = 0x4, scoped, tag = 'scoped memory for tpu_custom_call.1']
    #allocation5 [shape = 'u8[32768]{0}', space=vmem, size = 0x8000, scoped, tag = 'input window, operand 1, single buffered']
    #allocation6 [shape = 's32[1]{0}', space=sflag, size = 0x4, scoped, tag = 'scoped memory for tpu_custom_call.1']
    #allocation7 [shape = 'u8[65536]{0}', space=vmem, size = 0x10000, scoped, tag = 'input window, operand 3, single buffered']
    #allocation8 [shape = 'u8[4096]{0}', space=vmem, size = 0x1000, scoped, tag = 'output window, operand 0, single buffered']
    %10 = vsyncpa [#allocation3], 0
    %11 = vsyncpa [#allocation6], 0
    %12 = vsyncpa [#allocation4], 0
    // Predicated region
    $region2: #{tpu_custom_call.1} parent=1 // pred_check
      _
    $region3: #{tpu_custom_call.1} parent=1 // pred_check_branch
      %14 = sbr.rel (0) target = $region5
    $region4: #{tpu_custom_call.1} parent=1 // pred_region
      %16 = vsyncadd [#allocation3], 0
      %s18 = sshll.u32 %s0, 4
      %s19 = int_to_ptr.hbm [resolvable:$true] %s18
      %s20 = sshll.u32 [#allocation2], 4
      %s21 = int_to_ptr.vmem [resolvable:$true] %s20
      %23 = dma.hbm_to_vmem [thread:$0]  %s19, 128, %s21, [#allocation3]
    $region5: #{tpu_custom_call.1} parent=1 // pred_fallthru
      _
    // Predicated region
    $region6: #{tpu_custom_call.1} parent=1 // pred_check
      _
    $region7: #{tpu_custom_call.1} parent=1 // pred_check_branch
      %25 = sbr.rel (0) target = $region9
    $region8: #{tpu_custom_call.1} parent=1 // pred_region
      %27 = vsyncadd [#allocation6], 0
      %s28 = sshll.u32 %s1, 4
      %s29 = int_to_ptr.hbm [resolvable:$true] %s28
      %s30 = sshll.u32 [#allocation5], 4
      %s31 = int_to_ptr.vmem [resolvable:$true] %s30
      %36 = dma.hbm_to_vmem [thread:$0]  %s29, 1024, %s31, [#allocation6], 128, 128, 8
    $region9: #{tpu_custom_call.1} parent=1 // pred_fallthru
      _
    // Predicated region
    $region10: #{tpu_custom_call.1} parent=1 // pred_check
      _
    $region11: #{tpu_custom_call.1} parent=1 // pred_check_branch
      %38 = sbr.rel (0) target = $region13
    $region12: #{tpu_custom_call.1} parent=1 // pred_region
      _
    $region13: #{tpu_custom_call.1} parent=1 // pred_fallthru
      _
    // Predicated region
    $region14: #{tpu_custom_call.1} parent=1 // pred_check
      _
    $region15: #{tpu_custom_call.1} parent=1 // pred_check_branch
      %40 = sbr.rel (0) target = $region17
    $region16: #{tpu_custom_call.1} parent=1 // pred_region
      %42 = vsyncadd [#allocation6], 0
      %s43 = sshll.u32 %s3, 4
      %s44 = int_to_ptr.hbm [resolvable:$true] %s43
      %s45 = sshll.u32 [#allocation7], 4
      %s46 = int_to_ptr.vmem [resolvable:$true] %s45
      %51 = dma.hbm_to_vmem [thread:$0]  %s44, 2048, %s46, [#allocation6], 128, 128, 8
    $region17: #{tpu_custom_call.1} parent=1 // pred_fallthru
      _
    // Predicated region
    $region18: #{tpu_custom_call.1} parent=1 // pred_check
      _
    $region19: #{tpu_custom_call.1} parent=1 // pred_check_branch
      %53 = sbr.rel (0) target = $region21
    $region20: #{tpu_custom_call.1} parent=1 // pred_region
      _
    $region21: #{tpu_custom_call.1} parent=1 // pred_fallthru
      _
    // Predicated region
    $region22: #{tpu_custom_call.1} parent=1 // pred_check
      _
    $region23: #{tpu_custom_call.1} parent=1 // pred_check_branch
      %55 = sbr.rel (0) target = $region25
    $region24: #{tpu_custom_call.1} parent=1 // pred_region
      %57 = dma.done [#allocation3], 128
    $region25: #{tpu_custom_call.1} parent=1 // pred_fallthru
      _
    // Predicated region
    $region26: #{tpu_custom_call.1} parent=1 // pred_check
      _
    $region27: #{tpu_custom_call.1} parent=1 // pred_check_branch
      %59 = sbr.rel (0) target = $region29
    $region28: #{tpu_custom_call.1} parent=1 // pred_region
      %61 = dma.done [#allocation6], 1024
    $region29: #{tpu_custom_call.1} parent=1 // pred_fallthru
      _
    // Predicated region
    $region30: #{tpu_custom_call.1} parent=1 // pred_check
      _
    $region31: #{tpu_custom_call.1} parent=1 // pred_check_branch
      %63 = sbr.rel (0) target = $region33
    $region32: #{tpu_custom_call.1} parent=1 // pred_region
      %65 = dma.done [#allocation6], 2048
    $region33: #{tpu_custom_call.1} parent=1 // pred_fallthru
      _
    %v66 = vld [vmem:[#allocation2] sm:$0xff]
    %v67 = vld [vmem:[#allocation5] sm:$0xff]
    %v68 = vld [vmem:[#allocation5 + $0x8] sm:$0xff]
    %v69 = vld [vmem:[#allocation5 + $0x10] sm:$0xff]
    %v70 = vld [vmem:[#allocation5 + $0x18] sm:$0xff]
    %v71 = vld [vmem:[#allocation5 + $0x20] sm:$0xff]
    %v72 = vld [vmem:[#allocation5 + $0x28] sm:$0xff]
    %v73 = vld [vmem:[#allocation5 + $0x30] sm:$0xff]
    %v74 = vld [vmem:[#allocation5 + $0x38] sm:$0xff]
    %v75 = vld [vmem:[%s2] sm:$0x1]
    %v77 = vperm.slane %v75, 0
    %vm79 = vcmask 523264
    %v81 = vsel %vm79, %v66, 0
    %83 = vmatpush.msra.mxu0 0.0
    %84 = vmatpush.msra.mxu0 0.0
    %85 = vmatpush.msra.mxu0 0.0
    %86 = vmatpush.msra.mxu0 0.0
    %87 = vmatpush.msra.mxu0 0.0
    %88 = vmatpush.msra.mxu0 0.0
    %89 = vmatpush.msra.mxu0 0.0
    %90 = vmatpush.msra.mxu0 0.0
    %91 = vmatpush.msra.mxu0 %v74
    %92 = vmatpush.msra.mxu0 %v73
    %93 = vmatpush.msra.mxu0 %v72
    %94 = vmatpush.msra.mxu0 %v71
    %95 = vmatpush.msra.mxu0 %v70
    %96 = vmatpush.msra.mxu0 %v69
    %97 = vmatpush.msra.mxu0 %v68
    %98 = vmatpush.msra.mxu0 %v67
    %99 = vmatmul.f32.gmra.mxu0 %v81
    %v100 = vpop.f32.mrf.mxu0
    %v101 = vadd.f32 %v77, %v100
    %102 = vdwg.mxu0
    %v103 = vmax.f32 %v101, 0.0
    %v104 = vld [vmem:[#allocation7] sm:$0xff]
    %v105 = vld [vmem:[#allocation7 + $0x8] sm:$0xff]
    %v106 = vld [vmem:[#allocation7 + $0x10] sm:$0xff]
    %v107 = vld [vmem:[#allocation7 + $0x18] sm:$0xff]
    %v108 = vld [vmem:[#allocation7 + $0x20] sm:$0xff]
    %v109 = vld [vmem:[#allocation7 + $0x28] sm:$0xff]
    %v110 = vld [vmem:[#allocation7 + $0x30] sm:$0xff]
    %v111 = vld [vmem:[#allocation7 + $0x38] sm:$0xff]
    %v112 = vld [vmem:[#allocation7 + $0x40] sm:$0xff]
    %v113 = vld [vmem:[#allocation7 + $0x48] sm:$0xff]
    %v114 = vld [vmem:[#allocation7 + $0x50] sm:$0xff]
    %v115 = vld [vmem:[#allocation7 + $0x58] sm:$0xff]
    %v116 = vld [vmem:[#allocation7 + $0x60] sm:$0xff]
    %v117 = vld [vmem:[#allocation7 + $0x68] sm:$0xff]
    %v118 = vld [vmem:[#allocation7 + $0x70] sm:$0xff]
    %v119 = vld [vmem:[#allocation7 + $0x78] sm:$0xff]
    %v120 = vld [vmem:[%s4] sm:$0x1]
    %v122 = vperm.slane %v120, 0
    %124 = vmatpush.msra.mxu0 %v119
    %125 = vmatpush.msra.mxu0 %v118
    %126 = vmatpush.msra.mxu0 %v117
    %127 = vmatpush.msra.mxu0 %v116
    %128 = vmatpush.msra.mxu0 %v115
    %129 = vmatpush.msra.mxu0 %v114
    %130 = vmatpush.msra.mxu0 %v113
    %131 = vmatpush.msra.mxu0 %v112
    %132 = vmatpush.msra.mxu0 %v111
    %133 = vmatpush.msra.mxu0 %v110
    %134 = vmatpush.msra.mxu0 %v109
    %135 = vmatpush.msra.mxu0 %v108
    %136 = vmatpush.msra.mxu0 %v107
    %137 = vmatpush.msra.mxu0 %v106
    %138 = vmatpush.msra.mxu0 %v105
    %139 = vmatpush.msra.mxu0 %v104
    %140 = vmatmul.f32.gmra.mxu0 %v103
    %v141 = vpop.f32.mrf.mxu0
    %v142 = vadd.f32 %v122, %v141
    %143 = vdwg.mxu0
    %144 = vst [vmem:[#allocation8] sm:$0xff] %v142
    // Predicated region
    $region34: #{tpu_custom_call.1} parent=1 // pred_check
      _
    $region35: #{tpu_custom_call.1} parent=1 // pred_check_branch
      %146 = sbr.rel (0) target = $region37
    $region36: #{tpu_custom_call.1} parent=1 // pred_region
      %148 = vsyncadd [#allocation4], 0
      %s150 = sshll.u32 [#allocation8], 4
      %s151 = int_to_ptr.vmem [resolvable:$true] %s150
      %s152 = sshll.u32 %s5, 4
      %s153 = int_to_ptr.hbm [resolvable:$true] %s152
      %155 = dma.vmem_to_hbm [thread:$0]  %s151, 128, %s153, [#allocation4]
    $region37: #{tpu_custom_call.1} parent=1 // pred_fallthru
      _
    // Predicated region
    $region38: #{tpu_custom_call.1} parent=1 // pred_check
      _
    $region39: #{tpu_custom_call.1} parent=1 // pred_check_branch
      %157 = sbr.rel (0) target = $region41
    $region40: #{tpu_custom_call.1} parent=1 // pred_region
      %159 = dma.done [#allocation4], 128
    $region41: #{tpu_custom_call.1} parent=1 // pred_fallthru
      _
    %160 = vsyncpa [#allocation3], 1
    %161 = vsyncpa [#allocation6], 1
    %162 = vsyncpa [#allocation4], 1

</llo_original>
